<compile_context>
chip_gen: v5e
topology: v5e:2x2
jax: 0.10.0
libtpu: 0.0.40
codegen_flags: <defaults>
</compile_context>

<pallas_src>
import functools

import numpy as np
import jax
import jax.numpy as jnp
from jax.experimental import pallas as pl
from jax.experimental.pallas import tpu as pltpu

CP = 8  # channel rows padded to one full f32 sublane group


def _round_up(x, m):
    return (x + m - 1) // m * m


def _conv_mxu_kernel(x_ref, w_ref, b_ref, o_ref, *, W, N):
    """Fused 3x3 conv (pre-folded weights) + bias + ReLU as ONE MXU matmul.

    x_ref : (CP, L)    f32 VMEM  channel-padded, row-major flattened, lane-padded image
    w_ref : (OC, 9*CP) f32 VMEM  folded weights, row index = tap*CP + channel
    b_ref : (OC, 1)    f32 VMEM  folded bias
    o_ref : (OC, N)    f32 VMEM  lane-dense output (trimmed in the wrapper)
    """
    x = x_ref[...]                                        # (CP, L)

    # im2col operand built in registers: tap (di, dj) is a pure lane shift of
    # the flattened image; 9 sublane-aligned (CP, N) slices -> (9*CP, N).
    taps = [x[:, di * W + dj: di * W + dj + N]
            for di in range(3) for dj in range(3)]
    col = jnp.concatenate(taps, axis=0)                   # (9*CP, N), stays in vregs

    out = jnp.dot(w_ref[...], col,
                  preferred_element_type=jnp.float32)     # (OC, N) on the MXU
    o_ref[...] = jnp.maximum(out + b_ref[...], 0.0)       # bias lane-broadcast + ReLU


def prepare_params(params):
    """One-time parameter prep (hoisted out of the per-call forward).

    Folds conv2/3/4 (in_channels=1 convs on the channel-summed input) into
    conv1:  W_comb[o,c] = w1[o,c] + (w2+w3+w4)[o,0],  b_comb = b1+b2+b3+b4,
    then lays the weights out as (OC, 9*CP) with row index = tap*CP + channel
    (channel axis zero-padded to CP so im2col blocks are sublane-aligned).
    """
    (w1, b1), (w2, b2), (w3, b3), (w4, b4) = params
    OC, C = w1.shape[0], w1.shape[1]
    w234 = (w2 + w3 + w4)[:, 0]                           # (OC, 3, 3)
    w_comb = w1 + w234[:, None, :, :]                     # (OC, C, 3, 3)
    b_comb = b1 + b2 + b3 + b4                            # (OC,)

    w_r = jnp.transpose(w_comb, (0, 2, 3, 1))             # (OC, 3, 3, C)
    w_r = jnp.pad(w_r, ((0, 0), (0, 0), (0, 0), (0, CP - C)))
    w_mat = w_r.reshape(OC, 9 * CP).astype(jnp.float32)   # (OC, 72)
    b_col = b_comb.reshape(OC, 1).astype(jnp.float32)     # (OC, 1)
    return jax.device_put(w_mat), jax.device_put(b_col)


def fused_model_forward(x_chw, w_mat, b_col):
    """x_chw: (C, H, W) f32 (i.e. x1.squeeze()); returns (OC, H-2, W-2) f32."""
    C, H, W = x_chw.shape
    OC = w_mat.shape[0]
    OH, OW = H - 2, W - 2

    N = _round_up(OH * W, 128)          # lane-dense matmul N dimension
    L = _round_up(2 * W + 2 + N, 128)   # flat length so every tap read is in bounds

    # Single pad op does both the channel padding (C -> CP) and the lane padding.
    x_flat = jnp.pad(x_chw.reshape(C, H * W), ((0, CP - C), (0, L - H * W)))

    cost = pl.CostEstimate(
        flops=2 * OC * 9 * CP * N,
        transcendentals=0,
        bytes_accessed=4 * (CP * L + OC * 9 * CP + OC + OC * N),
    )

    vmem = pl.BlockSpec(memory_space=pltpu.MemorySpace.VMEM)
    out_flat = pl.pallas_call(
        functools.partial(_conv_mxu_kernel, W=W, N=N),
        out_shape=jax.ShapeDtypeStruct((OC, N), jnp.float32),
        in_specs=[vmem, vmem, vmem],
        out_specs=vmem,
        cost_estimate=cost,
    )(x_flat, w_mat, b_col)

    # Minimal trim of the lane-dense rows back to the valid (OH, OW) interior.
    if N % W == 0:
        return jax.lax.slice(out_flat.reshape(OC, N // W, W),
                             (0, 0, 0), (OC, OH, OW))
    return out_flat[:, :OH * W].reshape(OC, OH, W)[:, :, :OW]


def init_params(key, C, OC):
    """Deterministic PyTorch-style (uniform) init; shapes match Model.__init__."""
    def conv_init(k, oc, ic, ksz):
        kw, kb = jax.random.split(k)
        bound = 1.0 / np.sqrt(ic * ksz * ksz)
        w = jax.random.uniform(kw, (oc, ic, ksz, ksz), jnp.float32, -bound, bound)
        b = jax.random.uniform(kb, (oc,), jnp.float32, -bound, bound)
        return w, b
    k1, k2, k3, k4 = jax.random.split(key, 4)
    return (conv_init(k1, OC, C, 3),   # conv1: Conv2d(3, 8, 3, padding=0)
            conv_init(k2, OC, 1, 3),   # conv2: Conv2d(1, 8, 3, padding=1)
            conv_init(k3, OC, 1, 3),   # conv3
            conv_init(k4, OC, 1, 3))   # conv4


def reference(x_chw, params):
    """Pure-JAX reference with the same (nearest runnable) semantics."""
    (w1, b1), (w2, b2), (w3, b3), (w4, b4) = params
    dn = ('NCHW', 'OIHW', 'NCHW')
    x4 = x_chw[None]                                   # (1, C, H, W)
    xs4 = jnp.sum(x_chw, axis=0)[None, None]           # (1, 1, H, W)

    def conv(inp, w):
        return jax.lax.conv_general_dilated(inp, w, (1, 1), 'VALID',
                                            dimension_numbers=dn)

    v4 = conv(x4, w1) + b1[None, :, None, None]
    v3 = conv(xs4, w2) + b2[None, :, None, None]
    v2 = conv(xs4, w3) + b3[None, :, None, None]
    v1 = conv(xs4, w4) + b4[None, :, None, None]
    return jnp.maximum(v1 + v2 + v3 + v4, 0.0)[0]


if __name__ == "__main__":
    key = jax.random.PRNGKey(0)
    kx, kp = jax.random.split(key)

    # small shapes consistent with x1 = torch.rand(1, 3, 64, 64)
    C, H, W, OC = 3, 16, 16, 8
    x1 = jax.random.uniform(kx, (1, C, H, W), jnp.float32)   # NCHW
    params = init_params(kp, C, OC)

    # one-time parameter prep, outside the jitted hot path
    w_mat, b_col = prepare_params(params)

    x_chw = jnp.squeeze(x1, axis=0)                          # x1.squeeze()
    forward = jax.jit(fused_model_forward)
    out = jax.block_until_ready(forward(x_chw, w_mat, b_col))

    assert out.shape == (OC, H - 2, W - 2), out.shape
    ref = reference(x_chw, params)
    np.testing.assert_allclose(np.asarray(out), np.asarray(ref),
                               atol=1e-4, rtol=1e-4)
    print("KERNEL_OK")
</pallas_src>

<mosaic_0001>
module attributes {stable_mosaic.version = 11 : i64} {
  func.func @_conv_mxu_kernel(%arg0: memref<8x384xf32, #tpu.memory_space<vmem>>, %arg1: memref<8x72xf32, #tpu.memory_space<vmem>>, %arg2: memref<8x1xf32, #tpu.memory_space<vmem>>, %arg3: memref<8x256xf32, #tpu.memory_space<vmem>>) attributes {dimension_semantics = [], scalar_prefetch = 0 : i64, scratch_operands = 0 : i64, tpu.core_type = #tpu.core_type<tc>} {
    %c0 = arith.constant 0 : index
    %c0_0 = arith.constant 0 : index
    %0 = vector.load %arg0[%c0, %c0_0] : memref<8x384xf32, #tpu.memory_space<vmem>>, vector<8x384xf32>
    %1 = vector.extract_strided_slice %0 {offsets = [0, 0], sizes = [8, 256], strides = [1, 1]} : vector<8x384xf32> to vector<8x256xf32>
    %2 = vector.extract_strided_slice %0 {offsets = [0, 1], sizes = [8, 256], strides = [1, 1]} : vector<8x384xf32> to vector<8x256xf32>
    %3 = vector.extract_strided_slice %0 {offsets = [0, 2], sizes = [8, 256], strides = [1, 1]} : vector<8x384xf32> to vector<8x256xf32>
    %4 = vector.extract_strided_slice %0 {offsets = [0, 16], sizes = [8, 256], strides = [1, 1]} : vector<8x384xf32> to vector<8x256xf32>
    %5 = vector.extract_strided_slice %0 {offsets = [0, 17], sizes = [8, 256], strides = [1, 1]} : vector<8x384xf32> to vector<8x256xf32>
    %6 = vector.extract_strided_slice %0 {offsets = [0, 18], sizes = [8, 256], strides = [1, 1]} : vector<8x384xf32> to vector<8x256xf32>
    %7 = vector.extract_strided_slice %0 {offsets = [0, 32], sizes = [8, 256], strides = [1, 1]} : vector<8x384xf32> to vector<8x256xf32>
    %8 = vector.extract_strided_slice %0 {offsets = [0, 33], sizes = [8, 256], strides = [1, 1]} : vector<8x384xf32> to vector<8x256xf32>
    %9 = vector.extract_strided_slice %0 {offsets = [0, 34], sizes = [8, 256], strides = [1, 1]} : vector<8x384xf32> to vector<8x256xf32>
    %10 = tpu.concatenate %1, %2, %3, %4, %5, %6, %7, %8, %9 in 0 : vector<8x256xf32>, vector<8x256xf32>, vector<8x256xf32>, vector<8x256xf32>, vector<8x256xf32>, vector<8x256xf32>, vector<8x256xf32>, vector<8x256xf32>, vector<8x256xf32> -> vector<72x256xf32>
    %c0_1 = arith.constant 0 : index
    %c0_2 = arith.constant 0 : index
    %11 = vector.load %arg1[%c0_1, %c0_2] : memref<8x72xf32, #tpu.memory_space<vmem>>, vector<8x72xf32>
    %cst = arith.constant dense<0.000000e+00> : vector<8x256xf32>
    %12 = tpu.matmul %11, %10, %cst {dimension_numbers = #tpu.dot_dimension_numbers<[1], [0], [0], [1], [0, 0, 1, 1], [], []>} : vector<8x72xf32>, vector<72x256xf32>, vector<8x256xf32> -> vector<8x256xf32>
    %c0_3 = arith.constant 0 : index
    %c0_4 = arith.constant 0 : index
    %13 = vector.load %arg2[%c0_3, %c0_4] : memref<8x1xf32, #tpu.memory_space<vmem>>, vector<8x1xf32>
    %14 = vector.broadcast %13 : vector<8x1xf32> to vector<8x256xf32>
    %15 = arith.addf %12, %14 : vector<8x256xf32>
    %cst_5 = arith.constant 0.000000e+00 : f32
    %16 = vector.broadcast %cst_5 : f32 to vector<8x256xf32>
    %17 = arith.maximumf %15, %16 : vector<8x256xf32>
    %c0_6 = arith.constant 0 : index
    %c0_7 = arith.constant 0 : index
    %18 = vector.load %arg3[%c0_6, %c0_7] : memref<8x256xf32, #tpu.memory_space<vmem>>, vector<8x256xf32>
    tpu.vector_store %arg3[%c0_6, %c0_7], %17 {strides = array<i32>} : memref<8x256xf32, #tpu.memory_space<vmem>>, vector<8x256xf32>,
    return
  }
}

</mosaic_0001>

<llo_original>
// kernel: fused_model_forward.1
$region0: #{fused_model_forward.1}
  #allocation0 [shape = 'u32[]', space=smem, size = 0x4, offset = 0x4, fixed_abs, tag = 'smem constant byte address 0x4 - core index']
  #allocation1 [shape = 'u32[72,128]{1,0:T(1,128)}', space=vmem, size = 0x9000, scoped, tag = 'internal scratch']
  %s0 = inlined_call_operand.vmem [shape: f32[8,384], index: 0, kind: input, shape index: {}]
  %s1 = inlined_call_operand.vmem [shape: f32[8,72], index: 1, kind: input, shape index: {}]
  %s2 = inlined_call_operand.vmem [shape: f32[8,1], index: 2, kind: input, shape index: {}]
  %s3 = inlined_call_operand.vmem [shape: f32[8,256], index: 3, kind: output, shape index: {}]
  %s4 = sld [smem:[#allocation0]]
  $region22: #{fused_model_forward.1} parent=0
    _
  %s6 = ssub.s32 1, %s4
  %s7 = scalar_select 0, %s6, %s4
  // Predicated region
  $region2: #{fused_model_forward.1} parent=0 // pred_check
    _
  $region3: #{fused_model_forward.1} parent=0 // pred_check_branch
    %9 = sbr.rel (0) target = $region5
  $region4: #{fused_model_forward.1} parent=0 // pred_region
    _
  $region5: #{fused_model_forward.1} parent=0 // pred_fallthru
    _
  // Predicated region
  $region6: #{fused_model_forward.1} parent=0 // pred_check
    _
  $region7: #{fused_model_forward.1} parent=0 // pred_check_branch
    %11 = sbr.rel (0) target = $region9
  $region8: #{fused_model_forward.1} parent=0 // pred_region
    _
  $region9: #{fused_model_forward.1} parent=0 // pred_fallthru
    _
  // Predicated region
  $region10: #{fused_model_forward.1} parent=0 // pred_check
    _
  $region11: #{fused_model_forward.1} parent=0 // pred_check_branch
    %13 = sbr.rel (0) target = $region13
  $region12: #{fused_model_forward.1} parent=0 // pred_region
    _
  $region13: #{fused_model_forward.1} parent=0 // pred_fallthru
    _
  %v14 = vld [vmem:[%s0] sm:$0xff]
  %v15 = vld [vmem:[%s0 + $0x8] sm:$0xff]
  %v16 = vld [vmem:[%s0 + $0x10] sm:$0xff]
  %20 = vrot.lane.b32.xlu0 %v14, 127
  %v21 = vpop.permute.xlu0 %20
  %22 = vrot.lane.b32.xlu0 %v15, 127
  %v23 = vpop.permute.xlu0 %22
  %24 = vrot.lane.b32.xlu0 %v16, 127
  %v25 = vpop.permute.xlu0 %24
  %vm26 = vcmask 1039360
  %v27 = vsel %vm26, %v21, %v23
  %v28 = vsel %vm26, %v23, %v25
  %31 = vrot.lane.b32.xlu0 %v14, 126
  %v32 = vpop.permute.xlu0 %31
  %33 = vrot.lane.b32.xlu0 %v15, 126
  %v34 = vpop.permute.xlu0 %33
  %35 = vrot.lane.b32.xlu0 %v16, 126
  %v36 = vpop.permute.xlu0 %35
  %vm37 = vcmask 1031168
  %v38 = vsel %vm37, %v32, %v34
  %v39 = vsel %vm37, %v34, %v36
  %42 = vrot.lane.b32.xlu0 %v14, 112
  %v43 = vpop.permute.xlu0 %42
  %44 = vrot.lane.b32.xlu0 %v15, 112
  %v45 = vpop.permute.xlu0 %44
  %46 = vrot.lane.b32.xlu0 %v16, 112
  %v47 = vpop.permute.xlu0 %46
  %vm48 = vcmask 916480
  %v49 = vsel %vm48, %v43, %v45
  %v50 = vsel %vm48, %v45, %v47
  %53 = vrot.lane.b32.xlu0 %v14, 111
  %v54 = vpop.permute.xlu0 %53
  %55 = vrot.lane.b32.xlu0 %v15, 111
  %v56 = vpop.permute.xlu0 %55
  %57 = vrot.lane.b32.xlu0 %v16, 111
  %v58 = vpop.permute.xlu0 %57
  %vm59 = vcmask 908288
  %v60 = vsel %vm59, %v54, %v56
  %v61 = vsel %vm59, %v56, %v58
  %64 = vrot.lane.b32.xlu0 %v14, 110
  %v65 = vpop.permute.xlu0 %64
  %66 = vrot.lane.b32.xlu0 %v15, 110
  %v67 = vpop.permute.xlu0 %66
  %68 = vrot.lane.b32.xlu0 %v16, 110
  %v69 = vpop.permute.xlu0 %68
  %vm70 = vcmask 900096
  %v71 = vsel %vm70, %v65, %v67
  %v72 = vsel %vm70, %v67, %v69
  %75 = vrot.lane.b32.xlu0 %v14, 96
  %v76 = vpop.permute.xlu0 %75
  %77 = vrot.lane.b32.xlu0 %v15, 96
  %v78 = vpop.permute.xlu0 %77
  %79 = vrot.lane.b32.xlu0 %v16, 96
  %v80 = vpop.permute.xlu0 %79
  %vm81 = vcmask 785408
  %v82 = vsel %vm81, %v76, %v78
  %v83 = vsel %vm81, %v78, %v80
  %86 = vrot.lane.b32.xlu0 %v14, 95
  %v87 = vpop.permute.xlu0 %86
  %88 = vrot.lane.b32.xlu0 %v15, 95
  %v89 = vpop.permute.xlu0 %88
  %90 = vrot.lane.b32.xlu0 %v16, 95
  %v91 = vpop.permute.xlu0 %90
  %vm92 = vcmask 777216
  %v93 = vsel %vm92, %v87, %v89
  %v94 = vsel %vm92, %v89, %v91
  %97 = vrot.lane.b32.xlu0 %v14, 94
  %v98 = vpop.permute.xlu0 %97
  %99 = vrot.lane.b32.xlu0 %v15, 94
  %v100 = vpop.permute.xlu0 %99
  %101 = vrot.lane.b32.xlu0 %v16, 94
  %v102 = vpop.permute.xlu0 %101
  %vm103 = vcmask 769024
  %v104 = vsel %vm103, %v98, %v100
  %v105 = vsel %vm103, %v100, %v102
  %v108 = vld [vmem:[%s1] sm:$0xff]
  %v109 = vld [vmem:[%s2] sm:$0xff]
  %111 = vset.pattern.permute.xlu0 0
  %112 = vperm.xlu0 %111, %v109
  %v113 = vpop.permute.xlu0 %112
  %vm115 = vcmask 588800
  %v117 = vsel %vm115, %v108, 0
  %119 = vmatpush.msra.mxu0 0.0
  %120 = vmatpush.msra.mxu0 0.0
  %121 = vmatpush.msra.mxu0 0.0
  %122 = vmatpush.msra.mxu0 0.0
  %123 = vmatpush.msra.mxu0 0.0
  %124 = vmatpush.msra.mxu0 0.0
  %125 = vmatpush.msra.mxu0 0.0
  %126 = vmatpush.msra.mxu0 %v104
  %127 = vmatpush.msra.mxu0 %v93
  %128 = vmatpush.msra.mxu0 %v82
  %129 = vmatpush.msra.mxu0 %v71
  %130 = vmatpush.msra.mxu0 %v60
  %131 = vmatpush.msra.mxu0 %v49
  %132 = vmatpush.msra.mxu0 %v38
  %133 = vmatpush.msra.mxu0 %v27
  %134 = vmatpush.msra.mxu0 %v14
  %135 = vmatmul.f32.gmra.mxu0 %v117
  %v136 = vpop.f32.mrf.mxu0
  %v137 = vadd.f32 %v113, %v136
  %138 = vdwg.mxu0
  %139 = vmatpush.msra.mxu0 0.0
  %140 = vmatpush.msra.mxu0 0.0
  %141 = vmatpush.msra.mxu0 0.0
  %142 = vmatpush.msra.mxu0 0.0
  %143 = vmatpush.msra.mxu0 0.0
  %144 = vmatpush.msra.mxu0 0.0
  %145 = vmatpush.msra.mxu0 0.0
  %146 = vmatpush.msra.mxu0 %v105
  %147 = vmatpush.msra.mxu0 %v94
  %148 = vmatpush.msra.mxu0 %v83
  %149 = vmatpush.msra.mxu0 %v72
  %150 = vmatpush.msra.mxu0 %v61
  %151 = vmatpush.msra.mxu0 %v50
  %152 = vmatpush.msra.mxu0 %v39
  %153 = vmatpush.msra.mxu0 %v28
  %154 = vmatpush.msra.mxu0 %v15
  %155 = vmatmul.f32.gmra.mxu0 %v117
  %v156 = vpop.f32.mrf.mxu0
  %v157 = vadd.f32 %v113, %v156
  %158 = vdwg.mxu0
  %v159 = vmax.f32 %v137, 0.0
  %v160 = vmax.f32 %v157, 0.0
  %161 = vst [vmem:[%s3] sm:$0xff] %v159
  %162 = vst [vmem:[%s3 + $0x8] sm:$0xff] %v160
  // Predicated region
  $region14: #{fused_model_forward.1} parent=0 // pred_check
    _
  $region15: #{fused_model_forward.1} parent=0 // pred_check_branch
    %164 = sbr.rel (0) target = $region17
  $region16: #{fused_model_forward.1} parent=0 // pred_region
    _
  $region17: #{fused_model_forward.1} parent=0 // pred_fallthru
    _
  // Predicated region
  $region18: #{fused_model_forward.1} parent=0 // pred_check
    _
  $region19: #{fused_model_forward.1} parent=0 // pred_check_branch
    %166 = sbr.rel (0) target = $region21
  $region20: #{fused_model_forward.1} parent=0 // pred_region
    _
  $region21: #{fused_model_forward.1} parent=0 // pred_fallthru
    _

</llo_original>
